<compile_context>
chip_gen: v7x
topology: tpu7x:2x2x1
jax: 0.10.0
libtpu: 0.0.40
codegen_flags: <defaults>
</compile_context>

<pallas_src>
import functools

import jax
import jax.numpy as jnp
from jax import lax
from jax.experimental import pallas as pl
from jax.experimental.pallas import tpu as pltpu


def _spatial_attn_kernel(x_ref, wqkv_ref, bqkv_ref, w2_ref, b2_ref, out_ref,
                         *, H, W):
    # x_ref/out_ref: (TB, C, H*W)   wqkv_ref: (3, C)   bqkv_ref: (3,) in SMEM
    # w2_ref/b2_ref: (C, 1)
    TB, C, HW = x_ref.shape
    x = x_ref[...].astype(jnp.float32)                         # (TB, C, HW)

    # --- q/k/v 1x1 convs (C -> 1) as a single batched MXU matmul ------------
    w = jnp.broadcast_to(wqkv_ref[...].astype(jnp.float32)[None], (TB, 3, C))
    qkv = lax.dot_general(w, x, (((2,), (1,)), ((0,), (0,))),
                          preferred_element_type=jnp.float32)  # (TB, 3, HW)
    qkv = qkv.reshape(TB, 3, H, W)                             # small relayout
    q = qkv[:, 0] + bqkv_ref[0]                                # (TB, H, W)
    k = qkv[:, 1] + bqkv_ref[1]
    v = qkv[:, 2] + bqkv_ref[2]

    # --- attention: softmax(q k^T) v (H is small -> single-pass softmax) ----
    s = jnp.einsum('bhw,bgw->bhg', q, k,
                   preferred_element_type=jnp.float32)         # (TB, H, H)
    m = jnp.max(s, axis=-1, keepdims=True)
    p = jnp.exp(s - m)
    l = jnp.sum(p, axis=-1, keepdims=True)                     # (TB, H, 1)
    o = jnp.einsum('bhg,bgw->bhw', p, v,
                   preferred_element_type=jnp.float32)         # (TB, H, W)
    # Fold the softmax denominator in AFTER the matmul: (TB,H,1) reciprocal on
    # the otherwise-idle EUP instead of an (H,H)-sized VPU divide.
    o = o * pl.reciprocal(l, approx=True)

    # --- 1x1 conv 1 -> C: per-channel scale + bias on the flat layout -------
    # (For large C this can become an MXU outer product; at small C the
    #  lane-dense broadcast FMA is already matched to the store bandwidth.)
    o_flat = o.reshape(TB, 1, HW)                              # (TB, 1, HW)
    z = (w2_ref[...].astype(jnp.float32)[None] * o_flat
         + b2_ref[...].astype(jnp.float32)[None])              # (TB, C, HW)
    out_ref[...] = z.astype(out_ref.dtype)


def _pick_batch_tile(B, C, HW, block_budget_bytes=2 << 20):
    """Largest TB that (a) divides B, (b) keeps one (TB, C, HW) f32 block under
    the budget (so in+out double-buffered blocks stay well inside v7x's 64 MiB
    and v5e's default scoped VMEM), and (c) leaves >= 2 grid steps when B >= 2
    so v7x's two TensorCores can split the parallel batch axis."""
    max_tb = max(1, block_budget_bytes // max(1, C * HW * 4))
    tb = 1
    for cand in range(1, B + 1):
        if B % cand or cand > max_tb:
            continue
        if B >= 2 and B // cand < 2:
            continue
        tb = cand
    return tb


def spatial_attention_convolution(x, wq, bq, wk, bk, wv, bv, w2, b2):
    """x: (B, C, H, W). Conv weights flattened from torch shapes:
    wq/wk/wv (C,) from (1,C,1,1); bq/bk/bv scalars; w2 (C,) from (C,1,1,1);
    b2 (C,)."""
    B, C, H, W = x.shape
    HW = H * W
    x_flat = x.reshape(B, C, HW)                               # free, contiguous
    wqkv = jnp.stack([wq, wk, wv], axis=0).astype(jnp.float32)             # (3, C)
    bqkv = jnp.stack([jnp.asarray(bq), jnp.asarray(bk),
                      jnp.asarray(bv)]).astype(jnp.float32)                # (3,)
    w2c = w2.astype(jnp.float32)[:, None]                                  # (C, 1)
    b2c = b2.astype(jnp.float32)[:, None]                                  # (C, 1)

    TB = _pick_batch_tile(B, C, HW)
    grid = (B // TB,)
    block_bytes = TB * C * HW * 4
    # in + out blocks, double buffered, plus headroom for in-kernel temporaries.
    vmem_limit = int(min(max(16 << 20, 8 * block_bytes), 48 << 20))

    kernel = functools.partial(_spatial_attn_kernel, H=H, W=W)
    out_flat = pl.pallas_call(
        kernel,
        out_shape=jax.ShapeDtypeStruct((B, C, HW), x.dtype),
        grid_spec=pltpu.PrefetchScalarGridSpec(
            num_scalar_prefetch=0,
            grid=grid,
            in_specs=[
                pl.BlockSpec((TB, C, HW), lambda b: (b, 0, 0)),
                pl.BlockSpec((3, C), lambda b: (0, 0)),
                pl.BlockSpec(memory_space=pltpu.MemorySpace.SMEM),  # bqkv scalars
                pl.BlockSpec((C, 1), lambda b: (0, 0)),
                pl.BlockSpec((C, 1), lambda b: (0, 0)),
            ],
            out_specs=pl.BlockSpec((TB, C, HW), lambda b: (b, 0, 0)),
        ),
        compiler_params=pltpu.CompilerParams(
            dimension_semantics=("parallel",),
            vmem_limit_bytes=vmem_limit),
    )(x_flat, wqkv, bqkv, w2c, b2c)
    return out_flat.reshape(B, C, H, W)


def _reference(x, wq, bq, wk, bk, wv, bv, w2, b2):
    q = jnp.einsum('bchw,c->bhw', x, wq) + bq
    k = jnp.einsum('bchw,c->bhw', x, wk) + bk
    v = jnp.einsum('bchw,c->bhw', x, wv) + bv
    s = jnp.einsum('bhw,bgw->bhg', q, k)
    attn = jax.nn.softmax(s, axis=-1)
    o = jnp.einsum('bhg,bgw->bhw', attn, v)
    return w2[None, :, None, None] * o[:, None, :, :] + b2[None, :, None, None]


if __name__ == "__main__":
    B, C, H, W = 2, 4, 16, 16
    key = jax.random.PRNGKey(0)
    kx, kwq, kbq, kwk, kbk, kwv, kbv, kw2, kb2 = jax.random.split(key, 9)

    x = jax.random.normal(kx, (B, C, H, W), dtype=jnp.float32)
    # Deterministic synthetic parameters (shapes implied by LazyConv2d 1x1).
    wq = jax.random.normal(kwq, (C,), dtype=jnp.float32) * 0.2
    bq = jax.random.normal(kbq, (), dtype=jnp.float32) * 0.1
    wk = jax.random.normal(kwk, (C,), dtype=jnp.float32) * 0.2
    bk = jax.random.normal(kbk, (), dtype=jnp.float32) * 0.1
    wv = jax.random.normal(kwv, (C,), dtype=jnp.float32) * 0.2
    bv = jax.random.normal(kbv, (), dtype=jnp.float32) * 0.1
    w2 = jax.random.normal(kw2, (C,), dtype=jnp.float32) * 0.2
    b2 = jax.random.normal(kb2, (C,), dtype=jnp.float32) * 0.1

    out = spatial_attention_convolution(x, wq, bq, wk, bk, wv, bv, w2, b2)
    out = jax.block_until_ready(out)

    ref = _reference(x, wq, bq, wk, bk, wv, bv, w2, b2)
    assert out.shape == (B, C, H, W)
    max_err = float(jnp.max(jnp.abs(out - ref)))
    # Slightly looser tolerance than exact-divide version because the kernel
    # uses the EUP approx reciprocal for the softmax denominator.
    assert jnp.allclose(out, ref, rtol=2e-3, atol=2e-3), max_err
    print("KERNEL_OK")
</pallas_src>

<mosaic_0001>
module attributes {stable_mosaic.version = 11 : i64} {
  func.func @_spatial_attn_kernel(%arg0: i32, %arg1: memref<1x4x256xf32, #tpu.memory_space<vmem>>, %arg2: memref<3x4xf32, #tpu.memory_space<vmem>>, %arg3: memref<3xf32, #tpu.memory_space<smem>>, %arg4: memref<4x1xf32, #tpu.memory_space<vmem>>, %arg5: memref<4x1xf32, #tpu.memory_space<vmem>>, %arg6: memref<1x4x256xf32, #tpu.memory_space<vmem>>) attributes {dimension_semantics = [#tpu.dimension_semantics<parallel>], iteration_bounds = array<i64: 2>, scalar_prefetch = 0 : i64, scratch_operands = 0 : i64, tpu.core_type = #tpu.core_type<tc>, window_params = [{transform_indices = @transform_0, window_bounds = array<i64: 1, 4, 256>}, {pipeline_mode = #tpu.pipeline_mode<synchronous>, transform_indices = @transform_1, window_bounds = array<i64: 3, 4>}, {transform_indices = @transform_2, window_bounds = array<i64: 3>}, {pipeline_mode = #tpu.pipeline_mode<synchronous>, transform_indices = @transform_3, window_bounds = array<i64: 4, 1>}, {pipeline_mode = #tpu.pipeline_mode<synchronous>, transform_indices = @transform_4, window_bounds = array<i64: 4, 1>}, {transform_indices = @transform_5, window_bounds = array<i64: 1, 4, 256>}]} {
    %c0 = arith.constant 0 : index
    %c0_0 = arith.constant 0 : index
    %c0_1 = arith.constant 0 : index
    %0 = vector.load %arg1[%c0, %c0_0, %c0_1] : memref<1x4x256xf32, #tpu.memory_space<vmem>>, vector<1x4x256xf32>
    %c0_2 = arith.constant 0 : index
    %c0_3 = arith.constant 0 : index
    %1 = vector.load %arg2[%c0_2, %c0_3] : memref<3x4xf32, #tpu.memory_space<vmem>>, vector<3x4xf32>
    %2 = vector.shape_cast %1 : vector<3x4xf32> to vector<1x3x4xf32>
    %cst = arith.constant dense<0.000000e+00> : vector<1x3x256xf32>
    %3 = tpu.matmul %2, %0, %cst {dimension_numbers = #tpu.dot_dimension_numbers<[2], [1], [1], [2], [0, 0, 0, 1, 1, 2], [0], [0]>} : vector<1x3x4xf32>, vector<1x4x256xf32>, vector<1x3x256xf32> -> vector<1x3x256xf32>
    %4 = vector.shape_cast %3 : vector<1x3x256xf32> to vector<1x3x16x16xf32>
    %5 = vector.extract_strided_slice %4 {offsets = [0, 0, 0, 0], sizes = [1, 1, 16, 16], strides = [1, 1, 1, 1]} : vector<1x3x16x16xf32> to vector<1x1x16x16xf32>
    %6 = vector.shape_cast %5 : vector<1x1x16x16xf32> to vector<1x16x16xf32>
    %c0_4 = arith.constant 0 : index
    %7 = memref.load %arg3[%c0_4] : memref<3xf32, #tpu.memory_space<smem>>
    %8 = vector.broadcast %7 : f32 to vector<1x16x16xf32>
    %9 = arith.addf %6, %8 : vector<1x16x16xf32>
    %10 = vector.extract_strided_slice %4 {offsets = [0, 1, 0, 0], sizes = [1, 1, 16, 16], strides = [1, 1, 1, 1]} : vector<1x3x16x16xf32> to vector<1x1x16x16xf32>
    %11 = vector.shape_cast %10 : vector<1x1x16x16xf32> to vector<1x16x16xf32>
    %c1 = arith.constant 1 : index
    %12 = memref.load %arg3[%c1] : memref<3xf32, #tpu.memory_space<smem>>
    %13 = vector.broadcast %12 : f32 to vector<1x16x16xf32>
    %14 = arith.addf %11, %13 : vector<1x16x16xf32>
    %15 = vector.extract_strided_slice %4 {offsets = [0, 2, 0, 0], sizes = [1, 1, 16, 16], strides = [1, 1, 1, 1]} : vector<1x3x16x16xf32> to vector<1x1x16x16xf32>
    %16 = vector.shape_cast %15 : vector<1x1x16x16xf32> to vector<1x16x16xf32>
    %c2 = arith.constant 2 : index
    %17 = memref.load %arg3[%c2] : memref<3xf32, #tpu.memory_space<smem>>
    %18 = vector.broadcast %17 : f32 to vector<1x16x16xf32>
    %19 = arith.addf %16, %18 : vector<1x16x16xf32>
    "tpu.trace_start"() <{level = 10 : i32, message = "bhw,bgw->bhg"}> : () -> ()
    %cst_5 = arith.constant dense<0.000000e+00> : vector<1x16x16xf32>
    %20 = tpu.matmul %9, %14, %cst_5 {dimension_numbers = #tpu.dot_dimension_numbers<[2], [2], [1], [1], [0, 0, 0, 1, 1, 1], [0], [0]>} : vector<1x16x16xf32>, vector<1x16x16xf32>, vector<1x16x16xf32> -> vector<1x16x16xf32>
    "tpu.trace_stop"() : () -> ()
    %cst_6 = arith.constant dense<0xFF800000> : vector<1x16xf32>
    %21 = vector.multi_reduction <maximumf>, %20, %cst_6 [2] : vector<1x16x16xf32> to vector<1x16xf32>
    %22 = vector.shape_cast %21 : vector<1x16xf32> to vector<1x16x1xf32>
    %23 = vector.broadcast %22 : vector<1x16x1xf32> to vector<1x16x16xf32>
    %24 = arith.subf %20, %23 : vector<1x16x16xf32>
    %25 = math.exp %24 : vector<1x16x16xf32>
    %cst_7 = arith.constant dense<0.000000e+00> : vector<1x16xf32>
    %26 = vector.multi_reduction <add>, %25, %cst_7 [2] : vector<1x16x16xf32> to vector<1x16xf32>
    %27 = vector.shape_cast %26 : vector<1x16xf32> to vector<1x16x1xf32>
    "tpu.trace_start"() <{level = 10 : i32, message = "bhg,bgw->bhw"}> : () -> ()
    %cst_8 = arith.constant dense<0.000000e+00> : vector<1x16x16xf32>
    %28 = tpu.matmul %25, %19, %cst_8 {dimension_numbers = #tpu.dot_dimension_numbers<[2], [1], [1], [2], [0, 0, 0, 1, 1, 2], [0], [0]>} : vector<1x16x16xf32>, vector<1x16x16xf32>, vector<1x16x16xf32> -> vector<1x16x16xf32>
    "tpu.trace_stop"() : () -> ()
    %29 = tpu.reciprocal %27 {approx = true} : vector<1x16x1xf32> -> vector<1x16x1xf32>
    %30 = vector.broadcast %29 : vector<1x16x1xf32> to vector<1x16x16xf32>
    %31 = arith.mulf %28, %30 : vector<1x16x16xf32>
    %32 = vector.shape_cast %31 : vector<1x16x16xf32> to vector<1x1x256xf32>
    %c0_9 = arith.constant 0 : index
    %c0_10 = arith.constant 0 : index
    %33 = vector.load %arg4[%c0_9, %c0_10] : memref<4x1xf32, #tpu.memory_space<vmem>>, vector<4x1xf32>
    %34 = vector.shape_cast %33 : vector<4x1xf32> to vector<1x4x1xf32>
    %35 = vector.broadcast %34 : vector<1x4x1xf32> to vector<1x4x256xf32>
    %36 = vector.broadcast %32 : vector<1x1x256xf32> to vector<1x4x256xf32>
    %37 = arith.mulf %35, %36 : vector<1x4x256xf32>
    %c0_11 = arith.constant 0 : index
    %c0_12 = arith.constant 0 : index
    %38 = vector.load %arg5[%c0_11, %c0_12] : memref<4x1xf32, #tpu.memory_space<vmem>>, vector<4x1xf32>
    %39 = vector.shape_cast %38 : vector<4x1xf32> to vector<1x4x1xf32>
    %40 = vector.broadcast %39 : vector<1x4x1xf32> to vector<1x4x256xf32>
    %41 = arith.addf %37, %40 : vector<1x4x256xf32>
    %c0_13 = arith.constant 0 : index
    %c0_14 = arith.constant 0 : index
    %c0_15 = arith.constant 0 : index
    %42 = vector.load %arg6[%c0_13, %c0_14, %c0_15] : memref<1x4x256xf32, #tpu.memory_space<vmem>>, vector<1x4x256xf32>
    tpu.vector_store %arg6[%c0_13, %c0_14, %c0_15], %41 {strides = array<i32>} : memref<1x4x256xf32, #tpu.memory_space<vmem>>, vector<1x4x256xf32>,
    return
  }
  func.func @transform_0(%arg0: i32) -> (i32, i32, i32) {
    %c0_i32 = arith.constant 0 : i32
    %c0_i32_0 = arith.constant 0 : i32
    %c0_i32_1 = arith.constant 0 : i32
    return %arg0, %c0_i32, %c0_i32_0 : i32, i32, i32
  }
  func.func @transform_1(%arg0: i32) -> (i32, i32) {
    %c0_i32 = arith.constant 0 : i32
    %c0_i32_0 = arith.constant 0 : i32
    %c0_i32_1 = arith.constant 0 : i32
    return %c0_i32, %c0_i32_0 : i32, i32
  }
  func.func @transform_2(%arg0: i32) -> i32 {
    %c0_i32 = arith.constant 0 : i32
    %c0_i32_0 = arith.constant 0 : i32
    return %c0_i32 : i32
  }
  func.func @transform_3(%arg0: i32) -> (i32, i32) {
    %c0_i32 = arith.constant 0 : i32
    %c0_i32_0 = arith.constant 0 : i32
    %c0_i32_1 = arith.constant 0 : i32
    return %c0_i32, %c0_i32_0 : i32, i32
  }
  func.func @transform_4(%arg0: i32) -> (i32, i32) {
    %c0_i32 = arith.constant 0 : i32
    %c0_i32_0 = arith.constant 0 : i32
    %c0_i32_1 = arith.constant 0 : i32
    return %c0_i32, %c0_i32_0 : i32, i32
  }
  func.func @transform_5(%arg0: i32) -> (i32, i32, i32) {
    %c0_i32 = arith.constant 0 : i32
    %c0_i32_0 = arith.constant 0 : i32
    %c0_i32_1 = arith.constant 0 : i32
    return %arg0, %c0_i32, %c0_i32_0 : i32, i32, i32
  }
}

</mosaic_0001>

<llo_original>
// kernel: tpu_custom_call.1
$region0: #{tpu_custom_call.1}
  #allocation0 [shape = 'u32[]', space=smem, size = 0x4, offset = 0x4, fixed_abs, tag = 'smem constant byte address 0x4 - core index']
  #allocation1 [shape = 'u32[144,128]{1,0:T(1,128)}', space=vmem, size = 0x12000, scoped, tag = 'internal scratch']
  %s0 = inlined_call_operand.hbm [shape: f32[2,4,256], index: 0, kind: input, shape index: {}]
  %s1 = inlined_call_operand.vmem [shape: f32[3,4], index: 1, kind: input, shape index: {}]
  %s2 = inlined_call_operand.vmem [shape: f32[3], index: 2, kind: input, shape index: {}]
  %s3 = inlined_call_operand.vmem [shape: f32[4,1], index: 3, kind: input, shape index: {}]
  %s4 = inlined_call_operand.vmem [shape: f32[4,1], index: 4, kind: input, shape index: {}]
  %s5 = inlined_call_operand.hbm [shape: f32[2,4,256], index: 5, kind: output, shape index: {}]
  %s6 = sld [smem:[#allocation0]]
  $region61: #{tpu_custom_call.1} parent=0
    _
  %s8 = ssub.s32 1, %s6
  %s9 = scalar_select 0, %s8, %s6
  $region1: #{tpu_custom_call.1} parent=0
    #allocation2 [shape = 'u8[8192]{0}', space=vmem, size = 0x2000, scoped, tag = 'input window, operand 0']
    #allocation3 [shape = 's32[2]{0}', space=sflag, size = 0x8, scoped, tag = 'scoped memory for tpu_custom_call.1']
    #allocation4 [shape = 's32[2]{0}', space=sflag, size = 0x8, scoped, tag = 'scoped memory for tpu_custom_call.1']
    #allocation5 [shape = 's32[2]{0}', space=sflag, size = 0x8, scoped, tag = 'scoped memory for tpu_custom_call.1']
    #allocation6 [shape = 'u8[512]{0}', space=smem, size = 0x200, scoped, tag = 'input window, operand 2, single buffered']
    #allocation7 [shape = 'u8[8192]{0}', space=vmem, size = 0x2000, scoped, tag = 'output window, operand 0']
    %10 = vsyncpa [#allocation3], 0
    %s11 = scalar_lea.sflag [#allocation3], 1
    %12 = vsyncpa %s11, 0
    %13 = vsyncpa [#allocation5], 0
    %14 = vsyncpa [#allocation4], 0
    %s15 = scalar_lea.sflag [#allocation4], 1
    %16 = vsyncpa %s15, 0
    loop: start=0, step=1, limit=4
    $region2: #{tpu_custom_call.1} parent=1 // loop_pre_header
      _
    $region3: #{tpu_custom_call.1} parent=1 // loop_header
      %s18 = sphi 0, %s22
      %p19 = scmp.ge.s32.totalorder %s18, 4
      %s28 = sphi 0, %s30
      %s31 = sphi 0, %s28
      %s32 = sphi 0, %s31
      %s48 = sphi 0, %s32
      %s52 = sphi 0, %s52
      %s54 = sphi 0, %s52
      %s55 = sphi 0, %s54
      %s69 = sphi 0, %s55
      %s73 = sphi 0, %s73
      %s75 = sphi 0, %s73
      %s76 = sphi 0, %s75
      %s90 = sphi 0, %s76
      %s94 = sphi 0, %s94
      %s96 = sphi 0, %s94
      %s97 = sphi 0, %s96
      %s111 = sphi 0, %s97
      %s115 = sphi 0, %s115
      %s117 = sphi 0, %s115
      %s118 = sphi 0, %s117
      %s132 = sphi 0, %s118
      %s138 = sphi 0, %s140
      %s141 = sphi 0, %s138
      %s142 = sphi 0, %s141
      %s158 = sphi 0, %s142
    $region4: #{tpu_custom_call.1} parent=1 // loop_header_branch
      %21 = sbr.rel (%p19) target = $region8
    $region5: #{tpu_custom_call.1} parent=1 // loop_body
      %s23 = ssub.s32 %s18, 1
      %s24 = ssub.s32 %s18, 2
      %s25 = sadd.s32 %s18, 1
      %s26 = ssub.s32 %s18, %s25
      %p27 = scmp.eq.s32.totalorder %s26, 0
      %s29 = sadd.s32 %s28, 1
      %s30 = scalar_select %p27, %s28, %s29
      %p33 = pneg %p27
      %p34 = scmp.eq.s32.totalorder %s18, 1
      %p35 = por %p33, %p34
      %p36 = scmp.ne.s32.totalorder %s28, %s31
      %p37 = scmp.eq.s32.totalorder %s18, 0
      %p38 = por %p36, %p37
      %p39 = scmp.ne.s32.totalorder %s28, %s31
      %p40 = scmp.eq.s32.totalorder %s23, 1
      %p41 = por %p39, %p40
      %p42 = scmp.ne.s32.totalorder %s31, %s32
      %p43 = scmp.eq.s32.totalorder %s23, 0
      %p44 = por %p42, %p43
      %p45 = scmp.ne.s32.totalorder %s31, %s32
      %p46 = scmp.eq.s32.totalorder %s24, 1
      %p47 = por %p45, %p46
      %p49 = scmp.ne.s32.totalorder %s32, %s48
      %p50 = scmp.eq.s32.totalorder %s24, 0
      %p51 = por %p49, %p50
      %s53 = sadd.s32 %s52, 1
      %p56 = scmp.eq.s32.totalorder %s18, 1
      %p57 = scmp.ne.s32.totalorder %s52, %s54
      %p58 = scmp.eq.s32.totalorder %s18, 0
      %p59 = por %p57, %p58
      %p60 = scmp.ne.s32.totalorder %s52, %s54
      %p61 = scmp.eq.s32.totalorder %s23, 1
      %p62 = por %p60, %p61
      %p63 = scmp.ne.s32.totalorder %s54, %s55
      %p64 = scmp.eq.s32.totalorder %s23, 0
      %p65 = por %p63, %p64
      %p66 = scmp.ne.s32.totalorder %s54, %s55
      %p67 = scmp.eq.s32.totalorder %s24, 1
      %p68 = por %p66, %p67
      %p70 = scmp.ne.s32.totalorder %s55, %s69
      %p71 = scmp.eq.s32.totalorder %s24, 0
      %p72 = por %p70, %p71
      %s74 = sadd.s32 %s73, 1
      %p77 = scmp.eq.s32.totalorder %s18, 1
      %p78 = scmp.ne.s32.totalorder %s73, %s75
      %p79 = scmp.eq.s32.totalorder %s18, 0
      %p80 = por %p78, %p79
      %p81 = scmp.ne.s32.totalorder %s73, %s75
      %p82 = scmp.eq.s32.totalorder %s23, 1
      %p83 = por %p81, %p82
      %p84 = scmp.ne.s32.totalorder %s75, %s76
      %p85 = scmp.eq.s32.totalorder %s23, 0
      %p86 = por %p84, %p85
      %p87 = scmp.ne.s32.totalorder %s75, %s76
      %p88 = scmp.eq.s32.totalorder %s24, 1
      %p89 = por %p87, %p88
      %p91 = scmp.ne.s32.totalorder %s76, %s90
      %p92 = scmp.eq.s32.totalorder %s24, 0
      %p93 = por %p91, %p92
      %s95 = sadd.s32 %s94, 1
      %p98 = scmp.eq.s32.totalorder %s18, 1
      %p99 = scmp.ne.s32.totalorder %s94, %s96
      %p100 = scmp.eq.s32.totalorder %s18, 0
      %p101 = por %p99, %p100
      %p102 = scmp.ne.s32.totalorder %s94, %s96
      %p103 = scmp.eq.s32.totalorder %s23, 1
      %p104 = por %p102, %p103
      %p105 = scmp.ne.s32.totalorder %s96, %s97
      %p106 = scmp.eq.s32.totalorder %s23, 0
      %p107 = por %p105, %p106
      %p108 = scmp.ne.s32.totalorder %s96, %s97
      %p109 = scmp.eq.s32.totalorder %s24, 1
      %p110 = por %p108, %p109
      %p112 = scmp.ne.s32.totalorder %s97, %s111
      %p113 = scmp.eq.s32.totalorder %s24, 0
      %p114 = por %p112, %p113
      %s116 = sadd.s32 %s115, 1
      %p119 = scmp.eq.s32.totalorder %s18, 1
      %p120 = scmp.ne.s32.totalorder %s115, %s117
      %p121 = scmp.eq.s32.totalorder %s18, 0
      %p122 = por %p120, %p121
      %p123 = scmp.ne.s32.totalorder %s115, %s117
      %p124 = scmp.eq.s32.totalorder %s23, 1
      %p125 = por %p123, %p124
      %p126 = scmp.ne.s32.totalorder %s117, %s118
      %p127 = scmp.eq.s32.totalorder %s23, 0
      %p128 = por %p126, %p127
      %p129 = scmp.ne.s32.totalorder %s117, %s118
      %p130 = scmp.eq.s32.totalorder %s24, 1
      %p131 = por %p129, %p130
      %p133 = scmp.ne.s32.totalorder %s118, %s132
      %p134 = scmp.eq.s32.totalorder %s24, 0
      %p135 = por %p133, %p134
      %s136 = ssub.s32 %s18, %s25
      %p137 = scmp.eq.s32.totalorder %s136, 0
      %s139 = sadd.s32 %s138, 1
      %s140 = scalar_select %p137, %s138, %s139
      %p143 = pneg %p137
      %p144 = scmp.eq.s32.totalorder %s18, 1
      %p145 = por %p143, %p144
      %p146 = scmp.ne.s32.totalorder %s138, %s141
      %p147 = scmp.eq.s32.totalorder %s18, 0
      %p148 = por %p146, %p147
      %p149 = scmp.ne.s32.totalorder %s138, %s141
      %p150 = scmp.eq.s32.totalorder %s23, 1
      %p151 = por %p149, %p150
      %p152 = scmp.ne.s32.totalorder %s141, %s142
      %p153 = scmp.eq.s32.totalorder %s23, 0
      %p154 = por %p152, %p153
      %p155 = scmp.ne.s32.totalorder %s141, %s142
      %p156 = scmp.eq.s32.totalorder %s24, 1
      %p157 = por %p155, %p156
      %p159 = scmp.ne.s32.totalorder %s142, %s158
      %p160 = scmp.eq.s32.totalorder %s24, 0
      %p161 = por %p159, %p160
      %p162 = scmp.le.s32.totalorder 1, %s18
      %p163 = scmp.lt.s32.totalorder %s18, 3
      %p164 = pnand %p162, %p163
      %p165 = pneg %p164
      // Predicated region
      $region9: #{tpu_custom_call.1} parent=5 // pred_check
        _
      $region10: #{tpu_custom_call.1} parent=5 // pred_check_branch
        %167 = sbr.rel (%p164) target = $region12
      $region11: #{tpu_custom_call.1} parent=5 // pred_region
        %s168 = ssub.s32 %s18, 1
        // Predicated region
        $region13: #{tpu_custom_call.1} parent=11 // pred_check
          %p169 = pneg %p65
        $region14: #{tpu_custom_call.1} parent=11 // pred_check_branch
          %171 = sbr.rel (%p169) target = $region16
        $region15: #{tpu_custom_call.1} parent=11 // pred_region
          _
        $region16: #{tpu_custom_call.1} parent=11 // pred_fallthru
          _
        // Predicated region
        $region17: #{tpu_custom_call.1} parent=11 // pred_check
          %p172 = pneg %p86
        $region18: #{tpu_custom_call.1} parent=11 // pred_check_branch
          %174 = sbr.rel (%p172) target = $region20
        $region19: #{tpu_custom_call.1} parent=11 // pred_region
          %s176 = ssub.s32 16, 16
          %177 = vsyncadd [#allocation5], %s176
          %s179 = sshll.u32 %s2, 4
          %s180 = int_to_ptr.vmem [resolvable:$true] %s179
          %182 = dma.vmem_to_smem %s180, 16, [#allocation6], [#allocation5]
        $region20: #{tpu_custom_call.1} parent=11 // pred_fallthru
          _
        // Predicated region
        $region21: #{tpu_custom_call.1} parent=11 // pred_check
          %p183 = pneg %p107
        $region22: #{tpu_custom_call.1} parent=11 // pred_check_branch
          %185 = sbr.rel (%p183) target = $region24
        $region23: #{tpu_custom_call.1} parent=11 // pred_region
          _
        $region24: #{tpu_custom_call.1} parent=11 // pred_fallthru
          _
        // Predicated region
        $region25: #{tpu_custom_call.1} parent=11 // pred_check
          %p186 = pneg %p128
        $region26: #{tpu_custom_call.1} parent=11 // pred_check_branch
          %188 = sbr.rel (%p186) target = $region28
        $region27: #{tpu_custom_call.1} parent=11 // pred_region
          _
        $region28: #{tpu_custom_call.1} parent=11 // pred_fallthru
          _
      $region12: #{tpu_custom_call.1} parent=5 // pred_fallthru
        _
      %p189 = scmp.lt.s32.totalorder %s18, 2
      // Predicated region
      $region29: #{tpu_custom_call.1} parent=5 // pred_check
        %p190 = pneg %p189
      $region30: #{tpu_custom_call.1} parent=5 // pred_check_branch
        %192 = sbr.rel (%p190) target = $region32
      $region31: #{tpu_custom_call.1} parent=5 // pred_region
        // Predicated region
        $region33: #{tpu_custom_call.1} parent=31 // pred_check
          %p193 = pneg %p38
        $region34: #{tpu_custom_call.1} parent=31 // pred_check_branch
          %195 = sbr.rel (%p193) target = $region36
        $region35: #{tpu_custom_call.1} parent=31 // pred_region
          %s196 = sand.u32 %s28, 1
          %s197 = scalar_lea.sflag [#allocation3], %s196
          %s198 = sand.u32 %s28, 1
          %s199 = smul.addr %s198, 8
          %s200 = scalar_lea.vmem [#allocation2], %s199
          %s202 = ssub.s32 128, 128
          %203 = vsyncadd %s197, %s202
          %s204 = smul.addr %s18, 2
          %s205 = smul.addr %s204, 64
          %s206 = scalar_lea.hbm %s0, %s205
          %s208 = sshll.u32 %s200, 4
          %s209 = int_to_ptr.vmem [resolvable:$true] %s208
          %211 = dma.hbm_to_vmem [thread:$0]  %s206, 128, %s209, %s197
        $region36: #{tpu_custom_call.1} parent=31 // pred_fallthru
          _
      $region32: #{tpu_custom_call.1} parent=5 // pred_fallthru
        _
      %p212 = scmp.le.s32.totalorder 1, %s18
      %p213 = scmp.lt.s32.totalorder %s18, 3
      %p214 = pnand %p212, %p213
      %p215 = pneg %p214
      // Predicated region
      $region37: #{tpu_custom_call.1} parent=5 // pred_check
        _
      $region38: #{tpu_custom_call.1} parent=5 // pred_check_branch
        %217 = sbr.rel (%p214) target = $region40
      $region39: #{tpu_custom_call.1} parent=5 // pred_region
        %s218 = ssub.s32 %s18, 1
        %s219 = sand.u32 %s31, 1
        %s220 = scalar_lea.sflag [#allocation3], %s219
        %s221 = sand.u32 %s31, 1
        %s222 = smul.addr %s221, 8
        %s223 = scalar_lea.vmem [#allocation2], %s222
        // Predicated region
        $region41: #{tpu_custom_call.1} parent=39 // pred_check
          %p224 = pneg %p44
        $region42: #{tpu_custom_call.1} parent=39 // pred_check_branch
          %226 = sbr.rel (%p224) target = $region44
        $region43: #{tpu_custom_call.1} parent=39 // pred_region
          %227 = dma.done %s220, 128
        $region44: #{tpu_custom_call.1} parent=39 // pred_fallthru
          _
        // Predicated region
        $region45: #{tpu_custom_call.1} parent=39 // pred_check
          %p228 = pneg %p86
        $region46: #{tpu_custom_call.1} parent=39 // pred_check_branch
          %230 = sbr.rel (%p228) target = $region48
        $region47: #{tpu_custom_call.1} parent=39 // pred_region
          %231 = dma.done [#allocation5], 16
        $region48: #{tpu_custom_call.1} parent=39 // pred_fallthru
          _
        %232 = sfence
        %s233 = sand.u32 %s31, 1
        %s234 = scalar_lea.sflag [#allocation3], %s233
        %s235 = sand.u32 %s31, 1
        %s236 = smul.addr %s235, 8
        %s237 = scalar_lea.vmem [#allocation2], %s236
        %p238 = pneg %p44
        %p239 = pneg %p41
        %p240 = pneg %p65
        %p241 = pneg %p62
        %p242 = pneg %p86
        %p243 = pneg %p83
        %p244 = pneg %p107
        %p245 = pneg %p104
        %p246 = pneg %p128
        %p247 = pneg %p125
        %p248 = pneg %p154
        %p249 = pneg %p151
        %s250 = sand.u32 %s141, 1
        %s251 = scalar_lea.sflag [#allocation4], %s250
        %s252 = sand.u32 %s141, 1
        %s253 = smul.addr %s252, 8
        %s254 = scalar_lea.vmem [#allocation7], %s253
        %v255 = vld [vmem:[%s223] sm:$0xff]
        %v256 = vld [vmem:[%s1] sm:$0x7]
        %v258 = vcombine.high %v255, %v255
        %vm259 = vcmask 31744
        %v261 = vsel %vm259, %v256, 0
        %vm263 = vcmask 1043456
        %v264 = vsel %vm263, %v255, 0
        %v266 = vsel %vm263, %v258, 0
        %268 = vmatprep.subr.mxu0 %v266
        %269 = vmatpush1.msra.mxu0 %v264
        %270 = vmatprep.subr.mxu0 0.0
        %271 = vmatpush1.msra.mxu0 0.0
        %272 = vmatprep.subr.mxu0 0.0
        %273 = vmatpush1.msra.mxu0 0.0
        %274 = vmatprep.subr.mxu0 0.0
        %275 = vmatpush1.msra.mxu0 0.0
        %276 = vmatprep.subr.mxu0 0.0
        %277 = vmatpush1.msra.mxu0 0.0
        %278 = vmatprep.subr.mxu0 0.0
        %279 = vmatpush1.msra.mxu0 0.0
        %280 = vmatprep.subr.mxu0 0.0
        %281 = vmatpush1.msra.mxu0 0.0
        %282 = vmatprep.subr.mxu0 0.0
        %283 = vmatpush1.msra.mxu0 0.0
        %284 = vmatprep.subr.mxu0 0.0
        %285 = vmatpush1.msra.mxu0 0.0
        %286 = vmatprep.subr.mxu0 0.0
        %287 = vmatpush1.msra.mxu0 0.0
        %288 = vmatprep.subr.mxu0 0.0
        %289 = vmatpush1.msra.mxu0 0.0
        %290 = vmatprep.subr.mxu0 0.0
        %291 = vmatpush1.msra.mxu0 0.0
        %292 = vmatprep.subr.mxu0 0.0
        %293 = vmatpush1.msra.mxu0 0.0
        %294 = vmatprep.subr.mxu0 0.0
        %295 = vmatpush1.msra.mxu0 0.0
        %296 = vmatprep.subr.mxu0 0.0
        %297 = vmatpush1.msra.mxu0 0.0
        %298 = vmatprep.subr.mxu0 0.0
        %299 = vmatpush1.msra.mxu0 0.0
        %300 = vmatprep.subr.mxu0 0.0
        %301 = vmatpush1.msra.mxu0 0.0
        %302 = vmatprep.subr.mxu0 0.0
        %303 = vmatpush1.msra.mxu0 0.0
        %304 = vmatprep.subr.mxu0 0.0
        %305 = vmatpush1.msra.mxu0 0.0
        %306 = vmatprep.subr.mxu0 0.0
        %307 = vmatpush1.msra.mxu0 0.0
        %308 = vmatprep.subr.mxu0 0.0
        %309 = vmatpush1.msra.mxu0 0.0
        %310 = vmatprep.subr.mxu0 0.0
        %311 = vmatpush1.msra.mxu0 0.0
        %312 = vmatprep.subr.mxu0 0.0
        %313 = vmatpush1.msra.mxu0 0.0
        %314 = vmatprep.subr.mxu0 0.0
        %315 = vmatpush1.msra.mxu0 0.0
        %316 = vmatprep.subr.mxu0 0.0
        %317 = vmatpush1.msra.mxu0 0.0
        %318 = vmatprep.subr.mxu0 0.0
        %319 = vmatpush1.msra.mxu0 0.0
        %320 = vmatprep.subr.mxu0 0.0
        %321 = vmatpush1.msra.mxu0 0.0
        %322 = vmatprep.subr.mxu0 0.0
        %323 = vmatpush1.msra.mxu0 0.0
        %324 = vmatprep.subr.mxu0 0.0
        %325 = vmatpush1.msra.mxu0 0.0
        %326 = vmatprep.subr.mxu0 0.0
        %327 = vmatpush1.msra.mxu0 0.0
        %328 = vmatprep.subr.mxu0 0.0
        %329 = vmatpush1.msra.mxu0 0.0
        %330 = vmatprep.subr.mxu0 0.0
        %331 = vmatpush1.msra.mxu0 0.0
        %332 = vmatprep.mubr.f32.mxu0 0.0
        %333 = vmatmul.mubr.f32.gmra.mrb[0].mxu0 %v261
        %v334 = vpop.f32.mrb[0].mxu0
        %v335 = vadd.f32 0.0, %v334
        %v336 = vpop.f32.mrb[0].mxu0
        %v337 = vadd.f32 0.0, %v336
        %338 = vdwg.mxu0
        %340 = vrot.lane.b32.xlu0 %v335, 112
        %v341 = vpop.permute.xlu0 %340
        %343 = vrot.lane.b32.xlu0 %v335, 96
        %v344 = vpop.permute.xlu0 %343
        %346 = vrot.lane.b32.xlu0 %v335, 80
        %v347 = vpop.permute.xlu0 %346
        %349 = vrot.lane.b32.xlu0 %v335, 64
        %v350 = vpop.permute.xlu0 %349
        %352 = vrot.lane.b32.xlu0 %v335, 48
        %v353 = vpop.permute.xlu0 %352
        %355 = vrot.lane.b32.xlu0 %v335, 32
        %v356 = vpop.permute.xlu0 %355
        %358 = vrot.lane.b32.xlu0 %v335, 16
        %v359 = vpop.permute.xlu0 %358
        %362 = vrot.lane.b32.xlu0 %v337, 112
        %v363 = vpop.permute.xlu0 %362
        %365 = vrot.lane.b32.xlu0 %v337, 96
        %v366 = vpop.permute.xlu0 %365
        %368 = vrot.lane.b32.xlu0 %v337, 80
        %v369 = vpop.permute.xlu0 %368
        %371 = vrot.lane.b32.xlu0 %v337, 64
        %v372 = vpop.permute.xlu0 %371
        %374 = vrot.lane.b32.xlu0 %v337, 48
        %v375 = vpop.permute.xlu0 %374
        %377 = vrot.lane.b32.xlu0 %v337, 32
        %v378 = vpop.permute.xlu0 %377
        %380 = vrot.lane.b32.xlu0 %v337, 16
        %v381 = vpop.permute.xlu0 %380
        %v383 = vcombine.low %v335, %v344
        %v385 = vunpack.c.l.s4 1983009808
        %v386 = vunpack.c.0.s8 %v385
        %v387 = vlaneseq
        %v388 = vshrl.u32 %v387, 7
        %v389 = vsub.s32 %v386, %v388
        %v390 = vrot.slane %v383, %v389
        %v391 = vcombine.low %v341, %v347
        %v393 = vunpack.c.l.s4 1983009808
        %v394 = vunpack.c.0.s8 %v393
        %v395 = vlaneseq
        %v396 = vshrl.u32 %v395, 7
        %v397 = vsub.s32 %v394, %v396
        %v398 = vrot.slane %v391, %v397
        %v399 = vcombine.low %v350, %v356
        %v401 = vunpack.c.l.s4 1983009808
        %v402 = vunpack.c.0.s8 %v401
        %v403 = vlaneseq
        %v404 = vshrl.u32 %v403, 7
        %v405 = vsub.s32 %v402, %v404
        %v406 = vrot.slane %v399, %v405
        %v407 = vcombine.low %v353, %v359
        %v409 = vunpack.c.l.s4 1983009808
        %v410 = vunpack.c.0.s8 %v409
        %v411 = vlaneseq
        %v412 = vshrl.u32 %v411, 7
        %v413 = vsub.s32 %v410, %v412
        %v414 = vrot.slane %v407, %v413
        %v415 = vcombine.low %v390, %v398
        %v416 = vcombine.high %v390, %v398
        %v418 = vunpack.c.l.s4 1934713408
        %v419 = vunpack.c.0.s8 %v418
        %v420 = vlaneseq
        %v421 = vshrl.u32 %v420, 7
        %v422 = vsub.s32 %v419, %v421
        %v423 = vrot.slane %v415, %v422
        %v425 = vunpack.c.l.s4 1934713408
        %v426 = vunpack.c.0.s8 %v425
        %v427 = vlaneseq
        %v428 = vshrl.u32 %v427, 7
        %v429 = vsub.s32 %v426, %v428
        %v430 = vrot.slane %v416, %v429
        %v431 = vcombine.low %v406, %v414
        %v432 = vcombine.high %v406, %v414
        %v434 = vunpack.c.l.s4 1934713408
        %v435 = vunpack.c.0.s8 %v434
        %v436 = vlaneseq
        %v437 = vshrl.u32 %v436, 7
        %v438 = vsub.s32 %v435, %v437
        %v439 = vrot.slane %v431, %v438
        %v441 = vunpack.c.l.s4 1934713408
        %v442 = vunpack.c.0.s8 %v441
        %v443 = vlaneseq
        %v444 = vshrl.u32 %v443, 7
        %v445 = vsub.s32 %v442, %v444
        %v446 = vrot.slane %v432, %v445
        %v447 = vcombine.low %v423, %v439
        %v448 = vcombine.high %v423, %v439
        %v449 = vcombine.low %v430, %v446
        %v450 = vcombine.low %v337, %v366
        %v452 = vunpack.c.l.s4 1983009808
        %v453 = vunpack.c.0.s8 %v452
        %v454 = vlaneseq
        %v455 = vshrl.u32 %v454, 7
        %v456 = vsub.s32 %v453, %v455
        %v457 = vrot.slane %v450, %v456
        %v458 = vcombine.low %v363, %v369
        %v460 = vunpack.c.l.s4 1983009808
        %v461 = vunpack.c.0.s8 %v460
        %v462 = vlaneseq
        %v463 = vshrl.u32 %v462, 7
        %v464 = vsub.s32 %v461, %v463
        %v465 = vrot.slane %v458, %v464
        %v466 = vcombine.low %v372, %v378
        %v468 = vunpack.c.l.s4 1983009808
        %v469 = vunpack.c.0.s8 %v468
        %v470 = vlaneseq
        %v471 = vshrl.u32 %v470, 7
        %v472 = vsub.s32 %v469, %v471
        %v473 = vrot.slane %v466, %v472
        %v474 = vcombine.low %v375, %v381
        %v476 = vunpack.c.l.s4 1983009808
        %v477 = vunpack.c.0.s8 %v476
        %v478 = vlaneseq
        %v479 = vshrl.u32 %v478, 7
        %v480 = vsub.s32 %v477, %v479
        %v481 = vrot.slane %v474, %v480
        %v482 = vcombine.low %v457, %v465
        %v483 = vcombine.high %v457, %v465
        %v485 = vunpack.c.l.s4 1934713408
        %v486 = vunpack.c.0.s8 %v485
        %v487 = vlaneseq
        %v488 = vshrl.u32 %v487, 7
        %v489 = vsub.s32 %v486, %v488
        %v490 = vrot.slane %v482, %v489
        %v492 = vunpack.c.l.s4 1934713408
        %v493 = vunpack.c.0.s8 %v492
        %v494 = vlaneseq
        %v495 = vshrl.u32 %v494, 7
        %v496 = vsub.s32 %v493, %v495
        %v497 = vrot.slane %v483, %v496
        %v498 = vcombine.low %v473, %v481
        %v499 = vcombine.high %v473, %v481
        %v501 = vunpack.c.l.s4 1934713408
        %v502 = vunpack.c.0.s8 %v501
        %v503 = vlaneseq
        %v504 = vshrl.u32 %v503, 7
        %v505 = vsub.s32 %v502, %v504
        %v506 = vrot.slane %v498, %v505
        %v508 = vunpack.c.l.s4 1934713408
        %v509 = vunpack.c.0.s8 %v508
        %v510 = vlaneseq
        %v511 = vshrl.u32 %v510, 7
        %v512 = vsub.s32 %v509, %v511
        %v513 = vrot.slane %v499, %v512
        %v514 = vcombine.low %v490, %v506
        %v515 = vcombine.high %v490, %v506
        %v516 = vcombine.low %v497, %v513
        %s517 = sld [smem:[#allocation6]]
        %v518 = vstv %s517
        %v519 = vadd.f32 %v447, %v518
        %v520 = vadd.f32 %v514, %v518
        %s521 = sld [smem:[#allocation6 + $0x1]]
        %v522 = vstv %s521
        %v523 = vadd.f32 %v448, %v522
        %v524 = vadd.f32 %v515, %v522
        %s525 = sld [smem:[#allocation6 + $0x2]]
        %v526 = vstv %s525
        %v527 = vadd.f32 %v449, %v526
        %v528 = vadd.f32 %v516, %v526
        %vm529 = vcmask 130048
        %v531 = vsel %vm529, %v519, 0
        %v534 = vsel %vm529, %v520, 0
        %v537 = vsel %vm529, %v523, 0
        %v540 = vsel %vm529, %v524, 0
        %542 = vmatprep.subr.mxu0 0.0
        %543 = vmatpush1.xpose.msra.mxu0 %v537
        %544 = vmatprep.subr.mxu0 0.0
        %545 = vmatpush1.xpose.msra.mxu0 %v540
        %546 = vmatprep.subr.mxu0 0.0
        %547 = vmatpush1.xpose.msra.mxu0 0.0
        %548 = vmatprep.subr.mxu0 0.0
        %549 = vmatpush1.xpose.msra.mxu0 0.0
        %550 = vmatprep.subr.mxu0 0.0
        %551 = vmatpush1.xpose.msra.mxu0 0.0
        %552 = vmatprep.subr.mxu0 0.0
        %553 = vmatpush1.xpose.msra.mxu0 0.0
        %554 = vmatprep.subr.mxu0 0.0
        %555 = vmatpush1.xpose.msra.mxu0 0.0
        %556 = vmatprep.subr.mxu0 0.0
        %557 = vmatpush1.xpose.msra.mxu0 0.0
        %558 = vmatprep.subr.mxu0 0.0
        %559 = vmatpush1.xpose.msra.mxu0 0.0
        %560 = vmatprep.subr.mxu0 0.0
        %561 = vmatpush1.xpose.msra.mxu0 0.0
        %562 = vmatprep.subr.mxu0 0.0
        %563 = vmatpush1.xpose.msra.mxu0 0.0
        %564 = vmatprep.subr.mxu0 0.0
        %565 = vmatpush1.xpose.msra.mxu0 0.0
        %566 = vmatprep.subr.mxu0 0.0
        %567 = vmatpush1.xpose.msra.mxu0 0.0
        %568 = vmatprep.subr.mxu0 0.0
        %569 = vmatpush1.xpose.msra.mxu0 0.0
        %570 = vmatprep.subr.mxu0 0.0
        %571 = vmatpush1.xpose.msra.mxu0 0.0
        %572 = vmatprep.subr.mxu0 0.0
        %573 = vmatpush1.xpose.msra.mxu0 0.0
        %574 = vmatprep.subr.mxu0 0.0
        %575 = vmatpush1.xpose.msra.mxu0 0.0
        %576 = vmatprep.subr.mxu0 0.0
        %577 = vmatpush1.xpose.msra.mxu0 0.0
        %578 = vmatprep.subr.mxu0 0.0
        %579 = vmatpush1.xpose.msra.mxu0 0.0
        %580 = vmatprep.subr.mxu0 0.0
        %581 = vmatpush1.xpose.msra.mxu0 0.0
        %582 = vmatprep.subr.mxu0 0.0
        %583 = vmatpush1.xpose.msra.mxu0 0.0
        %584 = vmatprep.subr.mxu0 0.0
        %585 = vmatpush1.xpose.msra.mxu0 0.0
        %586 = vmatprep.subr.mxu0 0.0
        %587 = vmatpush1.xpose.msra.mxu0 0.0
        %588 = vmatprep.subr.mxu0 0.0
        %589 = vmatpush1.xpose.msra.mxu0 0.0
        %590 = vmatprep.subr.mxu0 0.0
        %591 = vmatpush1.xpose.msra.mxu0 0.0
        %592 = vmatprep.subr.mxu0 0.0
        %593 = vmatpush1.xpose.msra.mxu0 0.0
        %594 = vmatprep.subr.mxu0 0.0
        %595 = vmatpush1.xpose.msra.mxu0 0.0
        %596 = vmatprep.subr.mxu0 0.0
        %597 = vmatpush1.xpose.msra.mxu0 0.0
        %598 = vmatprep.subr.mxu0 0.0
        %599 = vmatpush1.xpose.msra.mxu0 0.0
        %600 = vmatprep.subr.mxu0 0.0
        %601 = vmatpush1.xpose.msra.mxu0 0.0
        %602 = vmatprep.subr.mxu0 0.0
        %603 = vmatpush1.xpose.msra.mxu0 0.0
        %604 = vmatprep.subr.mxu0 0.0
        %605 = vmatpush1.xpose.msra.mxu0 0.0
        %606 = vmatprep.mubr.f32.mxu0 0.0
        %607 = vmatmul.mubr.f32.gmra.mrb[0].mxu0 %v531
        %v608 = vpop.f32.mrb[0].mxu0
        %v609 = vadd.f32 0.0, %v608
        %v610 = vpop.f32.mrb[0].mxu0
        %611 = vmatprep.mubr.f32.mxu0 0.0
        %612 = vmatmul.mubr.f32.gmra.mrb[0].mxu0 %v534
        %v613 = vpop.f32.mrb[0].mxu0
        %v614 = vadd.f32 0.0, %v613
        %v615 = vpop.f32.mrb[0].mxu0
        %616 = vdwg.mxu0
        %v617 = vsel %vm529, %v609, -inf
        %618 = vmax.xlane.f32.xlu0 %v617
        %v619 = vpop.xlane.xlu0 %618
        %v620 = vsel %vm529, %v614, -inf
        %621 = vmax.xlane.f32.xlu0 %v620
        %v622 = vpop.xlane.xlu0 %621
        %v623 = vsub.f32 %v609, %v619
        %v624 = vsub.f32 %v614, %v622
        %v625 = vmul.f32 %v623, 1.442695
        %v626 = vpow.pop %v625
        %v627 = vmul.f32 %v624, 1.442695
        %v628 = vpow.pop %v627
        %v629 = vsel %vm529, %v626, 0.0
        %630 = vadd.xlane.f32.xlu0 %v629
        %v631 = vpop.xlane.xlu0 %630
        %v632 = vsel %vm529, %v628, 0.0
        %633 = vadd.xlane.f32.xlu0 %v632
        %v634 = vpop.xlane.xlu0 %633
        %v636 = vsel %vm529, %v626, 0
        %v639 = vsel %vm529, %v628, 0
        %641 = vmatprep.subr.mxu0 0.0
        %642 = vmatpush1.msra.mxu0 %v527
        %643 = vmatprep.subr.mxu0 0.0
        %644 = vmatpush1.msra.mxu0 %v528
        %645 = vmatprep.subr.mxu0 0.0
        %646 = vmatpush1.msra.mxu0 0.0
        %647 = vmatprep.subr.mxu0 0.0
        %648 = vmatpush1.msra.mxu0 0.0
        %649 = vmatprep.subr.mxu0 0.0
        %650 = vmatpush1.msra.mxu0 0.0
        %651 = vmatprep.subr.mxu0 0.0
        %652 = vmatpush1.msra.mxu0 0.0
        %653 = vmatprep.subr.mxu0 0.0
        %654 = vmatpush1.msra.mxu0 0.0
        %655 = vmatprep.subr.mxu0 0.0
        %656 = vmatpush1.msra.mxu0 0.0
        %657 = vmatprep.subr.mxu0 0.0
        %658 = vmatpush1.msra.mxu0 0.0
        %659 = vmatprep.subr.mxu0 0.0
        %660 = vmatpush1.msra.mxu0 0.0
        %661 = vmatprep.subr.mxu0 0.0
        %662 = vmatpush1.msra.mxu0 0.0
        %663 = vmatprep.subr.mxu0 0.0
        %664 = vmatpush1.msra.mxu0 0.0
        %665 = vmatprep.subr.mxu0 0.0
        %666 = vmatpush1.msra.mxu0 0.0
        %667 = vmatprep.subr.mxu0 0.0
        %668 = vmatpush1.msra.mxu0 0.0
        %669 = vmatprep.subr.mxu0 0.0
        %670 = vmatpush1.msra.mxu0 0.0
        %671 = vmatprep.subr.mxu0 0.0
        %672 = vmatpush1.msra.mxu0 0.0
        %673 = vmatprep.subr.mxu0 0.0
        %674 = vmatpush1.msra.mxu0 0.0
        %675 = vmatprep.subr.mxu0 0.0
        %676 = vmatpush1.msra.mxu0 0.0
        %677 = vmatprep.subr.mxu0 0.0
        %678 = vmatpush1.msra.mxu0 0.0
        %679 = vmatprep.subr.mxu0 0.0
        %680 = vmatpush1.msra.mxu0 0.0
        %681 = vmatprep.subr.mxu0 0.0
        %682 = vmatpush1.msra.mxu0 0.0
        %683 = vmatprep.subr.mxu0 0.0
        %684 = vmatpush1.msra.mxu0 0.0
        %685 = vmatprep.subr.mxu0 0.0
        %686 = vmatpush1.msra.mxu0 0.0
        %687 = vmatprep.subr.mxu0 0.0
        %688 = vmatpush1.msra.mxu0 0.0
        %689 = vmatprep.subr.mxu0 0.0
        %690 = vmatpush1.msra.mxu0 0.0
        %691 = vmatprep.subr.mxu0 0.0
        %692 = vmatpush1.msra.mxu0 0.0
        %693 = vmatprep.subr.mxu0 0.0
        %694 = vmatpush1.msra.mxu0 0.0
        %695 = vmatprep.subr.mxu0 0.0
        %696 = vmatpush1.msra.mxu0 0.0
        %697 = vmatprep.subr.mxu0 0.0
        %698 = vmatpush1.msra.mxu0 0.0
        %699 = vmatprep.subr.mxu0 0.0
        %700 = vmatpush1.msra.mxu0 0.0
        %701 = vmatprep.subr.mxu0 0.0
        %702 = vmatpush1.msra.mxu0 0.0
        %703 = vmatprep.subr.mxu0 0.0
        %704 = vmatpush1.msra.mxu0 0.0
        %705 = vmatprep.mubr.f32.mxu0 0.0
        %706 = vmatmul.mubr.f32.gmra.mrb[0].mxu0 %v636
        %v707 = vpop.f32.mrb[0].mxu0
        %v708 = vadd.f32 0.0, %v707
        %v709 = vpop.f32.mrb[0].mxu0
        %710 = vmatprep.mubr.f32.mxu0 0.0
        %711 = vmatmul.mubr.f32.gmra.mrb[0].mxu0 %v639
        %v712 = vpop.f32.mrb[0].mxu0
        %v713 = vadd.f32 0.0, %v712
        %v714 = vpop.f32.mrb[0].mxu0
        %715 = vdwg.mxu0
        %v716 = vrcp.pop %v631
        %v717 = vrcp.pop %v634
        %v718 = vmul.f32 %v708, %v716
        %v719 = vmul.f32 %v713, %v717
        %v720 = vcombine.high %v718, 0.0
        %v722 = vunpack.c.l.s4 1983009808
        %v723 = vunpack.c.0.s8 %v722
        %v724 = vlaneseq
        %v725 = vshrl.u32 %v724, 7
        %v726 = vsub.s32 %v723, %v725
        %v727 = vrot.slane %v718, %v726
        %v729 = vunpack.c.l.s4 1983009808
        %v730 = vunpack.c.0.s8 %v729
        %v731 = vlaneseq
        %v732 = vshrl.u32 %v731, 7
        %v733 = vsub.s32 %v730, %v732
        %v734 = vrot.slane %v720, %v733
        %v735 = vcombine.high %v727, 0.0
        %v737 = vunpack.c.l.s4 1934713408
        %v738 = vunpack.c.0.s8 %v737
        %v739 = vlaneseq
        %v740 = vshrl.u32 %v739, 7
        %v741 = vsub.s32 %v738, %v740
        %v742 = vrot.slane %v727, %v741
        %v744 = vunpack.c.l.s4 1934713408
        %v745 = vunpack.c.0.s8 %v744
        %v746 = vlaneseq
        %v747 = vshrl.u32 %v746, 7
        %v748 = vsub.s32 %v745, %v747
        %v749 = vrot.slane %v735, %v748
        %v750 = vcombine.high %v734, 0.0
        %v752 = vunpack.c.l.s4 1934713408
        %v753 = vunpack.c.0.s8 %v752
        %v754 = vlaneseq
        %v755 = vshrl.u32 %v754, 7
        %v756 = vsub.s32 %v753, %v755
        %v757 = vrot.slane %v734, %v756
        %v759 = vunpack.c.l.s4 1934713408
        %v760 = vunpack.c.0.s8 %v759
        %v761 = vlaneseq
        %v762 = vshrl.u32 %v761, 7
        %v763 = vsub.s32 %v760, %v762
        %v764 = vrot.slane %v750, %v763
        %v765 = vcombine.high %v742, 0.0
        %v766 = vcombine.high %v749, 0.0
        %v767 = vcombine.high %v757, 0.0
        %v768 = vcombine.high %v764, 0.0
        %v769 = vcombine.high %v719, 0.0
        %v771 = vunpack.c.l.s4 1983009808
        %v772 = vunpack.c.0.s8 %v771
        %v773 = vlaneseq
        %v774 = vshrl.u32 %v773, 7
        %v775 = vsub.s32 %v772, %v774
        %v776 = vrot.slane %v719, %v775
        %v778 = vunpack.c.l.s4 1983009808
        %v779 = vunpack.c.0.s8 %v778
        %v780 = vlaneseq
        %v781 = vshrl.u32 %v780, 7
        %v782 = vsub.s32 %v779, %v781
        %v783 = vrot.slane %v769, %v782
        %v784 = vcombine.high %v776, 0.0
        %v786 = vunpack.c.l.s4 1934713408
        %v787 = vunpack.c.0.s8 %v786
        %v788 = vlaneseq
        %v789 = vshrl.u32 %v788, 7
        %v790 = vsub.s32 %v787, %v789
        %v791 = vrot.slane %v776, %v790
        %v793 = vunpack.c.l.s4 1934713408
        %v794 = vunpack.c.0.s8 %v793
        %v795 = vlaneseq
        %v796 = vshrl.u32 %v795, 7
        %v797 = vsub.s32 %v794, %v796
        %v798 = vrot.slane %v784, %v797
        %v799 = vcombine.high %v783, 0.0
        %v801 = vunpack.c.l.s4 1934713408
        %v802 = vunpack.c.0.s8 %v801
        %v803 = vlaneseq
        %v804 = vshrl.u32 %v803, 7
        %v805 = vsub.s32 %v802, %v804
        %v806 = vrot.slane %v783, %v805
        %v808 = vunpack.c.l.s4 1934713408
        %v809 = vunpack.c.0.s8 %v808
        %v810 = vlaneseq
        %v811 = vshrl.u32 %v810, 7
        %v812 = vsub.s32 %v809, %v811
        %v813 = vrot.slane %v799, %v812
        %v814 = vcombine.high %v791, 0.0
        %v815 = vcombine.high %v798, 0.0
        %v816 = vcombine.high %v806, 0.0
        %v817 = vcombine.high %v813, 0.0
        %819 = vrot.lane.b32.xlu0 %v765, 16
        %v820 = vpop.permute.xlu0 %819
        %823 = vrot.lane.b32.xlu0 %v749, 32
        %v824 = vpop.permute.xlu0 %823
        %827 = vrot.lane.b32.xlu0 %v766, 48
        %v828 = vpop.permute.xlu0 %827
        %831 = vrot.lane.b32.xlu0 %v757, 64
        %v832 = vpop.permute.xlu0 %831
        %835 = vrot.lane.b32.xlu0 %v767, 80
        %v836 = vpop.permute.xlu0 %835
        %839 = vrot.lane.b32.xlu0 %v764, 96
        %v840 = vpop.permute.xlu0 %839
        %843 = vrot.lane.b32.xlu0 %v768, 112
        %v844 = vpop.permute.xlu0 %843
        %847 = vrot.lane.b32.xlu0 %v814, 16
        %v848 = vpop.permute.xlu0 %847
        %851 = vrot.lane.b32.xlu0 %v798, 32
        %v852 = vpop.permute.xlu0 %851
        %855 = vrot.lane.b32.xlu0 %v815, 48
        %v856 = vpop.permute.xlu0 %855
        %859 = vrot.lane.b32.xlu0 %v806, 64
        %v860 = vpop.permute.xlu0 %859
        %863 = vrot.lane.b32.xlu0 %v816, 80
        %v864 = vpop.permute.xlu0 %863
        %867 = vrot.lane.b32.xlu0 %v813, 96
        %v868 = vpop.permute.xlu0 %867
        %871 = vrot.lane.b32.xlu0 %v817, 112
        %v872 = vpop.permute.xlu0 %871
        %v874 = vsel %vm529, %v742, %v820
        %vm875 = vcmask 261120
        %v876 = vsel %vm875, %v874, %v824
        %vm877 = vcmask 392192
        %v878 = vsel %vm877, %v876, %v828
        %vm879 = vcmask 523264
        %v880 = vsel %vm879, %v878, %v832
        %vm881 = vcmask 654336
        %v882 = vsel %vm881, %v880, %v836
        %vm883 = vcmask 785408
        %v884 = vsel %vm883, %v882, %v840
        %vm885 = vcmask 916480
        %v886 = vsel %vm885, %v884, %v844
        %v887 = vsel %vm529, %v791, %v848
        %v888 = vsel %vm875, %v887, %v852
        %v889 = vsel %vm877, %v888, %v856
        %v890 = vsel %vm879, %v889, %v860
        %v891 = vsel %vm881, %v890, %v864
        %v892 = vsel %vm883, %v891, %v868
        %v893 = vsel %vm885, %v892, %v872
        %v894 = vld [vmem:[%s3] sm:$0xf]
        %896 = vset.pattern.permute.xlu0 0
        %897 = vperm.xlu0 %896, %v894
        %v898 = vpop.permute.xlu0 %897
        %v900 = vlaneseq
        %v901 = vshrl.u32 %v900, 7
        %v902 = vsub.s32 0, %v901
        %v903 = vrot.slane %v886, %v902
        %v904 = vlaneseq
        %v905 = vshrl.u32 %v904, 7
        %v906 = vsub.s32 0, %v905
        %v907 = vrot.slane %v893, %v906
        %v908 = vmul.f32 %v898, %v903
        %v909 = vmul.f32 %v898, %v907
        %v910 = vld [vmem:[%s4] sm:$0xf]
        %912 = vset.pattern.permute.xlu0 0
        %913 = vperm.xlu0 %912, %v910
        %v914 = vpop.permute.xlu0 %913
        %v916 = vadd.f32 %v908, %v914
        %v917 = vadd.f32 %v909, %v914
        %v920 = vcombine.low %v916, %v917
        %922 = vst [vmem:[%s254] sm:$0xff] %v920
        %s923 = sand.u32 %s141, 1
        %s924 = scalar_lea.sflag [#allocation4], %s923
        %s925 = sand.u32 %s141, 1
        %s926 = smul.addr %s925, 8
        %s927 = scalar_lea.vmem [#allocation7], %s926
        // Predicated region
        $region49: #{tpu_custom_call.1} parent=39 // pred_check
          %p928 = pneg %p151
        $region50: #{tpu_custom_call.1} parent=39 // pred_check_branch
          %930 = sbr.rel (%p928) target = $region52
        $region51: #{tpu_custom_call.1} parent=39 // pred_region
          %s932 = ssub.s32 128, 128
          %933 = vsyncadd %s924, %s932
          %s934 = smul.addr %s23, 2
          %s935 = smul.addr %s934, 64
          %s936 = scalar_lea.hbm %s5, %s935
          %s938 = sshll.u32 %s927, 4
          %s939 = int_to_ptr.vmem [resolvable:$true] %s938
          %941 = dma.vmem_to_hbm [thread:$0]  %s939, 128, %s936, %s924
        $region52: #{tpu_custom_call.1} parent=39 // pred_fallthru
          _
      $region40: #{tpu_custom_call.1} parent=5 // pred_fallthru
        _
      %p942 = scmp.le.s32.totalorder 2, %s18
      // Predicated region
      $region53: #{tpu_custom_call.1} parent=5 // pred_check
        %p943 = pneg %p942
      $region54: #{tpu_custom_call.1} parent=5 // pred_check_branch
        %945 = sbr.rel (%p943) target = $region56
      $region55: #{tpu_custom_call.1} parent=5 // pred_region
        %s946 = ssub.s32 %s18, 2
        // Predicated region
        $region57: #{tpu_custom_call.1} parent=55 // pred_check
          %p947 = pneg %p157
        $region58: #{tpu_custom_call.1} parent=55 // pred_check_branch
          %949 = sbr.rel (%p947) target = $region60
        $region59: #{tpu_custom_call.1} parent=55 // pred_region
          %s950 = sand.u32 %s142, 1
          %s951 = scalar_lea.sflag [#allocation4], %s950
          %s952 = sand.u32 %s142, 1
          %s953 = smul.addr %s952, 8
          %s954 = scalar_lea.vmem [#allocation7], %s953
          %955 = dma.done %s951, 128
        $region60: #{tpu_custom_call.1} parent=55 // pred_fallthru
          _
      $region56: #{tpu_custom_call.1} parent=5 // pred_fallthru
        _
    $region6: #{tpu_custom_call.1} parent=1 // loop_footer
      %s22 = sadd.s32 1, %s18
    $region7: #{tpu_custom_call.1} parent=1 // loop_footer_branch
      %17 = sbr.rel target = $region3
    $region8: #{tpu_custom_call.1} parent=1 // loop_exit
      _
    %956 = vsyncpa [#allocation3], 1
    %s957 = scalar_lea.sflag [#allocation3], 1
    %958 = vsyncpa %s957, 1
    %959 = vsyncpa [#allocation4], 1
    %s960 = scalar_lea.sflag [#allocation4], 1
    %961 = vsyncpa %s960, 1
    %962 = vsyncpa [#allocation5], 1
    %s963 = scalar_lea.sflag [#allocation5], 1
    %964 = vsyncpa %s963, 1

</llo_original>
